<compile_context>
chip_gen: v7x
topology: tpu7x:2x2x1
jax: 0.10.0
libtpu: 0.0.40
codegen_flags: <defaults>
</compile_context>

<pallas_src>
import functools

import jax
import jax.numpy as jnp
from jax.experimental import pallas as pl
from jax.experimental.pallas import tpu as pltpu

_SUBLANES = 8
_LANES = 128
_CHUNK_ROWS = 256                      # ~128 KiB f32 working set per chunk
_TARGET_BLOCK_BYTES = 4 * 1024 * 1024  # ~4 MiB per input per block (dtype-agnostic)
_MIN_BLOCK_BYTES = 128 * 1024          # don't split below ~128 KiB/block
_MIN_BLOCKS = 4                        # aim for >=4 blocks -> v7x megacore utilization
_MIN_PALLAS_ELEMS = 1 << 16            # below this, plain XLA beats launch/DMA overhead
_VMEM_LIMIT_BYTES = 32 * 1024 * 1024


def _cdiv(a, b):
    return -(-a // b)


def _round_up(x, m):
    return _cdiv(x, m) * m


def _part_loss_kernel(pred_ref, gt_ref, out_ref, *, inv_range, f,
                      block_rows, valid_rows_last, num_blocks):
    """One grid block: (8,128) f32 partial sum of f(|p-g|*inv_range)."""
    inv = jnp.float32(inv_range)

    def block_partial(valid_rows):
        # valid_rows: None (whole block valid) or static int; rows >= valid_rows
        # are boundary-block garbage and masked out AFTER applying f, so an
        # arbitrary user f (including f(0) != 0, or NaN on garbage) stays correct.
        num_chunks = _cdiv(block_rows, _CHUNK_ROWS)
        n_acc = 2 if num_chunks > 1 else 1
        accs = [jnp.zeros((_SUBLANES, _LANES), jnp.float32) for _ in range(n_acc)]
        for c in range(num_chunks):            # statically unrolled chunk loop
            r0 = c * _CHUNK_ROWS
            cr = min(_CHUNK_ROWS, block_rows - r0)
            if valid_rows is not None and r0 >= valid_rows:
                continue                       # statically skip fully-invalid chunks
            p = pred_ref[pl.ds(r0, cr), :].astype(jnp.float32)
            g = gt_ref[pl.ds(r0, cr), :].astype(jnp.float32)
            v = f(jnp.abs(p - g) * inv).astype(jnp.float32)
            if valid_rows is not None and r0 + cr > valid_rows:
                # Only the single straddling chunk of the last block pays for
                # the mask; comparison is against a static local row count.
                row = r0 + jax.lax.broadcasted_iota(jnp.int32, v.shape, 0)
                v = jnp.where(row < valid_rows, v, jnp.float32(0.0))
            accs[c % n_acc] = accs[c % n_acc] + v.reshape(
                cr // _SUBLANES, _SUBLANES, _LANES).sum(axis=0)
        total = accs[0]
        for a in accs[1:]:
            total = total + a
        return total

    if valid_rows_last is None:
        # Every block is fully valid; no masking anywhere.
        out_ref[0] = block_partial(None)
    elif num_blocks == 1:
        out_ref[0] = block_partial(valid_rows_last)
    else:
        is_last = pl.program_id(0) == num_blocks - 1

        @pl.when(jnp.logical_not(is_last))
        def _():
            out_ref[0] = block_partial(None)

        @pl.when(is_last)
        def _():
            out_ref[0] = block_partial(valid_rows_last)


def part_loss(pred_T, gt_T, img_size, f=lambda x: x * x, use_pallas=None):
    """Pallas implementation of PARTLoss.forward (returns f32 scalar)."""
    max_T = float(max(img_size))
    min_T = -max_T
    inv_range = 1.0 / (max_T - min_T)
    f32 = jnp.float32

    def _xla_sum(p, g):
        d = jnp.abs(p.astype(f32) - g.astype(f32))
        return jnp.sum(f(d * f32(inv_range))).astype(f32)

    n = int(pred_T.size)
    itemsize = jnp.dtype(pred_T.dtype).itemsize
    pack = _SUBLANES * max(1, 4 // itemsize)     # sublane packing: 8 f32 / 16 bf16 / 32 int8
    n_aligned = (n // _LANES) * _LANES
    rows = n_aligned // _LANES

    if use_pallas is None:
        use_pallas = n >= _MIN_PALLAS_ELEMS
    if not use_pallas or rows < pack:
        # Tiny-input fast path: fused XLA beats kernel launch + DMA setup.
        return _xla_sum(pred_T, gt_T)

    pred_flat = pred_T.reshape(-1)   # contiguous reshape: free bitcast
    gt_flat = gt_T.reshape(-1)

    tail = f32(0.0)
    if n_aligned != n:
        # <128-element ragged tail handled with a handful of XLA ops; avoids
        # materializing a full zero-padded copy of BOTH inputs in HBM.
        # TODO(synk): a truly zero-copy path for lane-unaligned n would need a
        # 1-D ANY-memory-space ref + manual DMA pipeline; XLA may still
        # materialize the lane-aligned prefix slice below.
        tail = _xla_sum(pred_flat[n_aligned:], gt_flat[n_aligned:])
        pred_flat = pred_flat[:n_aligned]
        gt_flat = gt_flat[:n_aligned]

    pred2 = pred_flat.reshape(rows, _LANES)      # lane-dense slab
    gt2 = gt_flat.reshape(rows, _LANES)

    # ---- block sizing (bytes-based, dtype-packed, megacore-aware) ----------
    cap_rows = max(pack, (_TARGET_BLOCK_BYTES // (_LANES * itemsize)) // pack * pack)
    floor_rows = max(pack, (_MIN_BLOCK_BYTES // (_LANES * itemsize)) // pack * pack)
    want_rows = _round_up(_cdiv(rows, _MIN_BLOCKS), pack)   # >=4 blocks when possible
    block_rows = min(cap_rows, max(floor_rows, want_rows))
    block_rows = min(block_rows, _round_up(rows, pack))     # never exceed (padded) rows
    num_blocks = _cdiv(rows, block_rows)
    valid_rows_last = rows - (num_blocks - 1) * block_rows
    needs_mask = valid_rows_last != block_rows

    kernel = functools.partial(
        _part_loss_kernel, inv_range=inv_range, f=f, block_rows=block_rows,
        valid_rows_last=(valid_rows_last if needs_mask else None),
        num_blocks=num_blocks)

    cost = pl.CostEstimate(
        flops=6 * rows * _LANES,
        transcendentals=0,
        bytes_accessed=2 * rows * _LANES * itemsize
        + num_blocks * _SUBLANES * _LANES * 4)

    partials = pl.pallas_call(
        kernel,
        out_shape=jax.ShapeDtypeStruct((num_blocks, _SUBLANES, _LANES), f32),
        grid=(num_blocks,),
        in_specs=[
            pl.BlockSpec((block_rows, _LANES), lambda i: (i, 0)),
            pl.BlockSpec((block_rows, _LANES), lambda i: (i, 0)),
        ],
        out_specs=pl.BlockSpec((1, _SUBLANES, _LANES), lambda i: (i, 0, 0)),
        compiler_params=pltpu.CompilerParams(
            dimension_semantics=("parallel",),
            vmem_limit_bytes=_VMEM_LIMIT_BYTES),
        cost_estimate=cost,
    )(pred2, gt2)

    # Tiny final cross-lane reduce + ragged tail, done by XLA.
    return jnp.sum(partials) + tail


if __name__ == "__main__":
    img_size = (16, 16)
    f = lambda x: x * x  # deterministic stand-in for the user-supplied callable

    def reference(pred_T, gt_T):
        max_T = float(max(img_size))
        min_T = -max_T
        p = (pred_T.astype(jnp.float32) - min_T) / (max_T - min_T)
        g = (gt_T.astype(jnp.float32) - min_T) / (max_T - min_T)
        return jnp.sum(f(jnp.abs(p - g)))

    key = jax.random.PRNGKey(0)
    cases = [
        ((2, 8, 2), jnp.float32),       # tiny -> XLA fallback path
        ((2, 256, 2), jnp.float32),     # n = 1024, lane-aligned, single block
        ((2, 9603, 2), jnp.float32),    # ragged rows + <128 tail: multi-block masked path
        ((4, 257, 2), jnp.bfloat16),    # bf16 streaming (16-row packing) + tail
        ((8, 4096, 4), jnp.float32),    # 128K elems -> 4 parallel blocks (megacore)
        ((2, 1024, 128), jnp.float32),  # 256K elems -> multi-chunk accumulation path
    ]
    for shape, dtype in cases:
        key, k1, k2 = jax.random.split(key, 3)
        pred_T = jax.random.uniform(
            k1, shape, jnp.float32, minval=-16.0, maxval=16.0).astype(dtype)
        gt_T = jax.random.uniform(
            k2, shape, jnp.float32, minval=-16.0, maxval=16.0).astype(dtype)

        loss = part_loss(pred_T, gt_T, img_size, f=f, use_pallas=True)
        loss = jax.block_until_ready(loss)
        ref = jax.block_until_ready(reference(pred_T, gt_T))
        assert jnp.allclose(loss, ref, rtol=1e-4, atol=1e-4), (
            shape, dtype, float(loss), float(ref))

    print("KERNEL_OK")
</pallas_src>

<mosaic_0001>
module attributes {stable_mosaic.version = 11 : i64} {
  func.func @_part_loss_kernel(%arg0: i32, %arg1: memref<8x128xf32, #tpu.memory_space<vmem>>, %arg2: memref<8x128xf32, #tpu.memory_space<vmem>>, %arg3: memref<1x8x128xf32, #tpu.memory_space<vmem>>) attributes {dimension_semantics = [#tpu.dimension_semantics<parallel>], iteration_bounds = array<i64: 1>, scalar_prefetch = 0 : i64, scratch_operands = 0 : i64, tpu.core_type = #tpu.core_type<tc>, window_params = [{transform_indices = @transform_0, window_bounds = array<i64: 8, 128>}, {transform_indices = @transform_1, window_bounds = array<i64: 8, 128>}, {transform_indices = @transform_2, window_bounds = array<i64: 1, 8, 128>}]} {
    %cst = arith.constant 0.000000e+00 : f32
    %0 = vector.broadcast %cst : f32 to vector<8x128xf32>
    %c0 = arith.constant 0 : index
    %c0_0 = arith.constant 0 : index
    %1 = vector.load %arg1[%c0, %c0_0] : memref<8x128xf32, #tpu.memory_space<vmem>>, vector<8x128xf32>
    %c0_1 = arith.constant 0 : index
    %c0_2 = arith.constant 0 : index
    %2 = vector.load %arg2[%c0_1, %c0_2] : memref<8x128xf32, #tpu.memory_space<vmem>>, vector<8x128xf32>
    %3 = arith.subf %1, %2 : vector<8x128xf32>
    %4 = math.absf %3 : vector<8x128xf32>
    %cst_3 = arith.constant 3.125000e-02 : f32
    %5 = vector.broadcast %cst_3 : f32 to vector<8x128xf32>
    %6 = arith.mulf %4, %5 : vector<8x128xf32>
    %7 = arith.mulf %6, %6 : vector<8x128xf32>
    %8 = vector.shape_cast %7 : vector<8x128xf32> to vector<1x8x128xf32>
    %cst_4 = arith.constant dense<0.000000e+00> : vector<8x128xf32>
    %9 = vector.multi_reduction <add>, %8, %cst_4 [0] : vector<1x8x128xf32> to vector<8x128xf32>
    %10 = arith.addf %0, %9 : vector<8x128xf32>
    %c0_5 = arith.constant 0 : index
    %c0_6 = arith.constant 0 : index
    %c0_7 = arith.constant 0 : index
    %11 = vector.load %arg3[%c0_5, %c0_6, %c0_7] : memref<1x8x128xf32, #tpu.memory_space<vmem>>, vector<1x8x128xf32>
    %12 = vector.shape_cast %11 : vector<1x8x128xf32> to vector<8x128xf32>
    %13 = vector.shape_cast %10 : vector<8x128xf32> to vector<1x8x128xf32>
    tpu.vector_store %arg3[%c0_5, %c0_6, %c0_7], %13 {strides = array<i32>} : memref<1x8x128xf32, #tpu.memory_space<vmem>>, vector<1x8x128xf32>,
    return
  }
  func.func @transform_0(%arg0: i32) -> (i32, i32) {
    %c0_i32 = arith.constant 0 : i32
    %c0_i32_0 = arith.constant 0 : i32
    return %arg0, %c0_i32 : i32, i32
  }
  func.func @transform_1(%arg0: i32) -> (i32, i32) {
    %c0_i32 = arith.constant 0 : i32
    %c0_i32_0 = arith.constant 0 : i32
    return %arg0, %c0_i32 : i32, i32
  }
  func.func @transform_2(%arg0: i32) -> (i32, i32, i32) {
    %c0_i32 = arith.constant 0 : i32
    %c0_i32_0 = arith.constant 0 : i32
    %c0_i32_1 = arith.constant 0 : i32
    return %arg0, %c0_i32, %c0_i32_0 : i32, i32, i32
  }
}

</mosaic_0001>

<llo_original>
// kernel: tpu_custom_call.1
$region0: #{tpu_custom_call.1}
  #allocation0 [shape = 'u32[]', space=smem, size = 0x4, offset = 0x4, fixed_abs, tag = 'smem constant byte address 0x4 - core index']
  #allocation1 [shape = 'u32[144,128]{1,0:T(1,128)}', space=vmem, size = 0x12000, scoped, tag = 'internal scratch']
  %s0 = inlined_call_operand.hbm [shape: f32[8,128], index: 0, kind: input, shape index: {}]
  %s1 = inlined_call_operand.hbm [shape: f32[8,128], index: 1, kind: input, shape index: {}]
  %s2 = inlined_call_operand.hbm [shape: f32[1,8,128], index: 2, kind: output, shape index: {}]
  %s3 = sld [smem:[#allocation0]]
  $region26: #{tpu_custom_call.1} parent=0
    _
  %s5 = ssub.s32 1, %s3
  %s6 = scalar_select 0, %s5, %s3
  $region1: #{tpu_custom_call.1} parent=0
    #allocation2 [shape = 'u8[4096]{0}', space=vmem, size = 0x1000, scoped, tag = 'input window, operand 0, single buffered']
    #allocation3 [shape = 's32[1]{0}', space=sflag, size = 0x4, scoped, tag = 'scoped memory for tpu_custom_call.1']
    #allocation4 [shape = 's32[1]{0}', space=sflag, size = 0x4, scoped, tag = 'scoped memory for tpu_custom_call.1']
    #allocation5 [shape = 'u8[4096]{0}', space=vmem, size = 0x1000, scoped, tag = 'input window, operand 1, single buffered']
    #allocation6 [shape = 's32[1]{0}', space=sflag, size = 0x4, scoped, tag = 'scoped memory for tpu_custom_call.1']
    #allocation7 [shape = 'u8[4096]{0}', space=vmem, size = 0x1000, scoped, tag = 'output window, operand 0, single buffered']
    %7 = vsyncpa [#allocation3], 0
    %8 = vsyncpa [#allocation6], 0
    %9 = vsyncpa [#allocation4], 0
    // Predicated region
    $region2: #{tpu_custom_call.1} parent=1 // pred_check
      _
    $region3: #{tpu_custom_call.1} parent=1 // pred_check_branch
      %11 = sbr.rel (0) target = $region5
    $region4: #{tpu_custom_call.1} parent=1 // pred_region
      %s13 = ssub.s32 128, 128
      %14 = vsyncadd [#allocation3], %s13
      %s16 = sshll.u32 [#allocation2], 4
      %s17 = int_to_ptr.vmem [resolvable:$true] %s16
      %19 = dma.hbm_to_vmem [thread:$0]  %s0, 128, %s17, [#allocation3]
    $region5: #{tpu_custom_call.1} parent=1 // pred_fallthru
      _
    // Predicated region
    $region6: #{tpu_custom_call.1} parent=1 // pred_check
      _
    $region7: #{tpu_custom_call.1} parent=1 // pred_check_branch
      %21 = sbr.rel (0) target = $region9
    $region8: #{tpu_custom_call.1} parent=1 // pred_region
      %s23 = ssub.s32 128, 128
      %24 = vsyncadd [#allocation6], %s23
      %s26 = sshll.u32 [#allocation5], 4
      %s27 = int_to_ptr.vmem [resolvable:$true] %s26
      %29 = dma.hbm_to_vmem [thread:$0]  %s1, 128, %s27, [#allocation6]
    $region9: #{tpu_custom_call.1} parent=1 // pred_fallthru
      _
    // Predicated region
    $region10: #{tpu_custom_call.1} parent=1 // pred_check
      _
    $region11: #{tpu_custom_call.1} parent=1 // pred_check_branch
      %31 = sbr.rel (0) target = $region13
    $region12: #{tpu_custom_call.1} parent=1 // pred_region
      %32 = dma.done [#allocation3], 128
    $region13: #{tpu_custom_call.1} parent=1 // pred_fallthru
      _
    // Predicated region
    $region14: #{tpu_custom_call.1} parent=1 // pred_check
      _
    $region15: #{tpu_custom_call.1} parent=1 // pred_check_branch
      %34 = sbr.rel (0) target = $region17
    $region16: #{tpu_custom_call.1} parent=1 // pred_region
      %35 = dma.done [#allocation6], 128
    $region17: #{tpu_custom_call.1} parent=1 // pred_fallthru
      _
    %v36 = vld [vmem:[#allocation2] sm:$0xff]
    %v37 = vld [vmem:[#allocation5] sm:$0xff]
    %v38 = vsub.f32 %v36, %v37
    %v39 = vand.u32 2147483647, %v38
    %v40 = vmul.f32 %v39, 0.03125
    %v41 = vmul.f32 %v40, %v40
    %v42 = vadd.f32 %v41, 0.0
    %v43 = vadd.f32 %v42, 0.0
    %44 = vst [vmem:[#allocation7] sm:$0xff] %v43
    // Predicated region
    $region18: #{tpu_custom_call.1} parent=1 // pred_check
      _
    $region19: #{tpu_custom_call.1} parent=1 // pred_check_branch
      %46 = sbr.rel (0) target = $region21
    $region20: #{tpu_custom_call.1} parent=1 // pred_region
      %s48 = ssub.s32 128, 128
      %49 = vsyncadd [#allocation4], %s48
      %s51 = sshll.u32 [#allocation7], 4
      %s52 = int_to_ptr.vmem [resolvable:$true] %s51
      %54 = dma.vmem_to_hbm [thread:$0]  %s52, 128, %s2, [#allocation4]
    $region21: #{tpu_custom_call.1} parent=1 // pred_fallthru
      _
    // Predicated region
    $region22: #{tpu_custom_call.1} parent=1 // pred_check
      _
    $region23: #{tpu_custom_call.1} parent=1 // pred_check_branch
      %56 = sbr.rel (0) target = $region25
    $region24: #{tpu_custom_call.1} parent=1 // pred_region
      %57 = dma.done [#allocation4], 128
    $region25: #{tpu_custom_call.1} parent=1 // pred_fallthru
      _
    %58 = vsyncpa [#allocation3], 1
    %59 = vsyncpa [#allocation6], 1
    %60 = vsyncpa [#allocation4], 1

</llo_original>
